<compile_context>
chip_gen: v7x
topology: tpu7x:2x2x1
jax: 0.10.0
libtpu: 0.0.40
codegen_flags: <defaults>
</compile_context>

<pallas_src>
import jax
import jax.numpy as jnp
from jax import lax
from jax.experimental import pallas as pl
from jax.experimental.pallas import tpu as pltpu

MAX_LENGTH = 20   # kept for parity with the PyTorch module; output length is S, as in PyTorch.

_TB = 8  # decoder-step rows per grid program (sublane multiple)


# ---------------------------------------------------------------------------
# One-time (per sequence) encoder projection:  P = enc @ W.T
# ---------------------------------------------------------------------------
def _project_enc_kernel(enc_ref, w_ref, p_ref):
    # enc_ref: (S, H)   w_ref: (H, H) in PyTorch (out, in) layout   p_ref: (S, H)
    # P[s, k] = sum_j enc[s, j] * W[k, j]
    p_ref[...] = lax.dot_general(
        enc_ref[...], w_ref[...],
        dimension_numbers=(((1,), (1,)), ((), ())),
        preferred_element_type=jnp.float32)


def precompute_projected_encoder(encoder_outputs, weight):
    """encoder_outputs: (S, 1, H); weight: (H, H) (PyTorch nn.Linear weight).
    Returns P = enc @ W.T of shape (S, H). Call once per sequence and reuse for
    every decode step.  The Linear bias is intentionally dropped: it adds the same
    constant (hidden . bias) to every score and softmax is shift-invariant."""
    S, b, H = encoder_outputs.shape
    assert b == 1, f"Attn expects encoder batch dim == 1, got {b}"
    enc = encoder_outputs.reshape(S, H)
    if enc.dtype != jnp.float32:
        enc = enc.astype(jnp.float32)
    w = weight if weight.dtype == jnp.float32 else weight.astype(jnp.float32)

    return pl.pallas_call(
        _project_enc_kernel,
        out_shape=jax.ShapeDtypeStruct((S, H), jnp.float32),
        in_specs=[
            pl.BlockSpec(memory_space=pltpu.MemorySpace.VMEM),   # enc (S, H)
            pl.BlockSpec(memory_space=pltpu.MemorySpace.VMEM),   # W   (H, H)
        ],
        out_specs=pl.BlockSpec(memory_space=pltpu.MemorySpace.VMEM),
    )(enc, w)


# ---------------------------------------------------------------------------
# Batched per-step scoring + softmax:  out[b] = softmax_s( hidden[b] . P[s] )
# ---------------------------------------------------------------------------
def _attn_scores_kernel(h_ref, p_ref, out_ref):
    # h_ref: (TB, H)   p_ref: (S, H)   out_ref: (TB, S)
    h = h_ref[...]
    p = p_ref[...]

    # scores[b, s] = sum_k h[b, k] * P[s, k]   (single contraction; lane-dense (TB, S) result)
    scores = lax.dot_general(
        h, p,
        dimension_numbers=(((1,), (1,)), ((), ())),
        preferred_element_type=jnp.float32)                      # (TB, S)

    # Row softmax over the lane axis. Bias term omitted (softmax shift-invariance).
    m = jnp.max(scores, axis=-1, keepdims=True)
    e = jnp.exp(scores - m)
    denom = jnp.sum(e, axis=-1, keepdims=True)
    out_ref[...] = (e * pl.reciprocal(denom, approx=False)).astype(out_ref.dtype)


def attn_general_batched(hidden_batch, projected_enc):
    """hidden_batch: (B, H) — B independent decoder hidden states (steps/heads).
    projected_enc:  (S, H) — output of precompute_projected_encoder.
    Returns softmax attention weights of shape (B, S)."""
    B, H = hidden_batch.shape
    S, Hp = projected_enc.shape
    assert H == Hp, (H, Hp)

    h = hidden_batch if hidden_batch.dtype == jnp.float32 else hidden_batch.astype(jnp.float32)
    p = projected_enc if projected_enc.dtype == jnp.float32 else projected_enc.astype(jnp.float32)

    # Pad the batch axis up to a sublane multiple so each grid program gets a full tile.
    b_pad = ((B + _TB - 1) // _TB) * _TB
    if b_pad != B:
        h = jnp.pad(h, ((0, b_pad - B), (0, 0)))

    out = pl.pallas_call(
        _attn_scores_kernel,
        out_shape=jax.ShapeDtypeStruct((b_pad, S), jnp.float32),
        grid=(b_pad // _TB,),
        in_specs=[
            pl.BlockSpec((_TB, H), lambda i: (i, 0)),   # hidden rows for this program
            pl.BlockSpec((S, H), lambda i: (0, 0)),     # shared projected encoder (not re-DMA'd)
        ],
        out_specs=pl.BlockSpec((_TB, S), lambda i: (i, 0)),
        compiler_params=pltpu.CompilerParams(
            # Batch axis is independent -> shard across both TensorCores on v7x.
            dimension_semantics=("parallel",)),
    )(h, p)

    return out[:B]


def attn_general_forward(hidden, encoder_outputs, weight):
    """PyTorch-compatible single-step entry point.
    hidden: (1, H); encoder_outputs: (S, 1, H); weight: (H, H).
    Returns (1, 1, S) softmax attention weights, matching Attn.forward.
    NOTE: prefer precompute_projected_encoder + attn_general_batched in a decode
    loop; this convenience wrapper redoes the projection every call."""
    S = encoder_outputs.shape[0]
    H = hidden.shape[-1]
    P = precompute_projected_encoder(encoder_outputs, weight)
    out = attn_general_batched(hidden.reshape(1, H), P)          # (1, S)
    return out.reshape(1, 1, S)


# ---------------------------------------------------------------------------
# Pure-JAX reference (faithful to the PyTorch math, including the bias).
# ---------------------------------------------------------------------------
def _reference_batched(hidden_batch, encoder_outputs, weight, bias):
    S = encoder_outputs.shape[0]
    H = hidden_batch.shape[-1]
    enc = encoder_outputs.reshape(S, H)
    energy = enc @ weight.T + bias[None, :]                      # (S, H)
    scores = hidden_batch @ energy.T                             # (B, S)
    return jax.nn.softmax(scores, axis=-1)


if __name__ == "__main__":
    key = jax.random.PRNGKey(0)
    k_h, k_e, k_w, k_b = jax.random.split(key, 4)

    hidden_size = 32
    seq_len = 8
    num_steps = 16   # batched decoder steps handled by ONE pallas_call

    # Deterministic "parameter init" matching nn.Linear(hidden_size, hidden_size) shapes.
    bound = 1.0 / (hidden_size ** 0.5)
    weight = jax.random.uniform(k_w, (hidden_size, hidden_size),
                                minval=-bound, maxval=bound, dtype=jnp.float32)
    bias = jax.random.uniform(k_b, (hidden_size,),
                              minval=-bound, maxval=bound, dtype=jnp.float32)

    # Inputs consistent with the PyTorch forward: hidden (1, H) per step, encoder (S, 1, H).
    hidden_batch = jax.random.normal(k_h, (num_steps, hidden_size), dtype=jnp.float32)
    encoder_outputs = jax.random.normal(k_e, (seq_len, 1, hidden_size), dtype=jnp.float32)

    # One-time encoder projection, then one batched scoring+softmax call for all steps.
    P = precompute_projected_encoder(encoder_outputs, weight)
    out = attn_general_batched(hidden_batch, P)
    out = jax.block_until_ready(out)

    ref = _reference_batched(hidden_batch, encoder_outputs, weight, bias)
    assert out.shape == (num_steps, seq_len), out.shape
    assert jnp.allclose(out, ref, atol=1e-5, rtol=1e-5), (out, ref)

    # PyTorch-shaped single-step path: (1, 1, S), identical to row 0 of the batched result.
    out1 = attn_general_forward(hidden_batch[:1], encoder_outputs, weight)
    out1 = jax.block_until_ready(out1)
    assert out1.shape == (1, 1, seq_len), out1.shape
    assert jnp.allclose(out1.reshape(seq_len), out[0], atol=1e-5, rtol=1e-5)

    # TODO(synk): 'dot' and 'concat' scoring variants not implemented; 'general' is the hot path here.
    print("KERNEL_OK")
</pallas_src>

<mosaic_0001>
module attributes {stable_mosaic.version = 11 : i64} {
  func.func @_project_enc_kernel(%arg0: memref<8x32xf32, #tpu.memory_space<vmem>>, %arg1: memref<32x32xf32, #tpu.memory_space<vmem>>, %arg2: memref<8x32xf32, #tpu.memory_space<vmem>>) attributes {dimension_semantics = [], scalar_prefetch = 0 : i64, scratch_operands = 0 : i64, tpu.core_type = #tpu.core_type<tc>} {
    %c0 = arith.constant 0 : index
    %c0_0 = arith.constant 0 : index
    %0 = vector.load %arg0[%c0, %c0_0] : memref<8x32xf32, #tpu.memory_space<vmem>>, vector<8x32xf32>
    %c0_1 = arith.constant 0 : index
    %c0_2 = arith.constant 0 : index
    %1 = vector.load %arg1[%c0_1, %c0_2] : memref<32x32xf32, #tpu.memory_space<vmem>>, vector<32x32xf32>
    %cst = arith.constant dense<0.000000e+00> : vector<8x32xf32>
    %2 = tpu.matmul %0, %1, %cst {dimension_numbers = #tpu.dot_dimension_numbers<[1], [1], [0], [0], [0, 0, 1, 0], [], []>} : vector<8x32xf32>, vector<32x32xf32>, vector<8x32xf32> -> vector<8x32xf32>
    %c0_3 = arith.constant 0 : index
    %c0_4 = arith.constant 0 : index
    %3 = vector.load %arg2[%c0_3, %c0_4] : memref<8x32xf32, #tpu.memory_space<vmem>>, vector<8x32xf32>
    tpu.vector_store %arg2[%c0_3, %c0_4], %2 {strides = array<i32>} : memref<8x32xf32, #tpu.memory_space<vmem>>, vector<8x32xf32>,
    return
  }
}

</mosaic_0001>

<llo_original>
// kernel: tpu_custom_call.1
$region0: #{tpu_custom_call.1}
  #allocation0 [shape = 'u32[]', space=smem, size = 0x4, offset = 0x4, fixed_abs, tag = 'smem constant byte address 0x4 - core index']
  #allocation1 [shape = 'u32[144,128]{1,0:T(1,128)}', space=vmem, size = 0x12000, scoped, tag = 'internal scratch']
  %s0 = inlined_call_operand.hbm [shape: f32[8,32], index: 0, kind: input, shape index: {}]
  %s1 = inlined_call_operand.hbm [shape: f32[32,32], index: 1, kind: input, shape index: {}]
  %s2 = inlined_call_operand.hbm [shape: f32[8,32], index: 2, kind: output, shape index: {}]
  %s3 = sld [smem:[#allocation0]]
  $region26: #{tpu_custom_call.1} parent=0
    _
  %s5 = ssub.s32 1, %s3
  %s6 = scalar_select 0, %s5, %s3
  $region1: #{tpu_custom_call.1} parent=0
    #allocation2 [shape = 'u8[4096]{0}', space=vmem, size = 0x1000, scoped, tag = 'input window, operand 0, single buffered']
    #allocation3 [shape = 's32[1]{0}', space=sflag, size = 0x4, scoped, tag = 'scoped memory for tpu_custom_call.1']
    #allocation4 [shape = 's32[1]{0}', space=sflag, size = 0x4, scoped, tag = 'scoped memory for tpu_custom_call.1']
    #allocation5 [shape = 'u8[16384]{0}', space=vmem, size = 0x4000, scoped, tag = 'input window, operand 1, single buffered']
    #allocation6 [shape = 's32[1]{0}', space=sflag, size = 0x4, scoped, tag = 'scoped memory for tpu_custom_call.1']
    #allocation7 [shape = 'u8[4096]{0}', space=vmem, size = 0x1000, scoped, tag = 'output window, operand 0, single buffered']
    %7 = vsyncpa [#allocation3], 0
    %8 = vsyncpa [#allocation6], 0
    %9 = vsyncpa [#allocation4], 0
    // Predicated region
    $region2: #{tpu_custom_call.1} parent=1 // pred_check
      _
    $region3: #{tpu_custom_call.1} parent=1 // pred_check_branch
      %11 = sbr.rel (0) target = $region5
    $region4: #{tpu_custom_call.1} parent=1 // pred_region
      %s13 = ssub.s32 128, 128
      %14 = vsyncadd [#allocation3], %s13
      %s16 = sshll.u32 [#allocation2], 4
      %s17 = int_to_ptr.vmem [resolvable:$true] %s16
      %19 = dma.hbm_to_vmem [thread:$0]  %s0, 128, %s17, [#allocation3]
    $region5: #{tpu_custom_call.1} parent=1 // pred_fallthru
      _
    // Predicated region
    $region6: #{tpu_custom_call.1} parent=1 // pred_check
      _
    $region7: #{tpu_custom_call.1} parent=1 // pred_check_branch
      %21 = sbr.rel (0) target = $region9
    $region8: #{tpu_custom_call.1} parent=1 // pred_region
      %s23 = ssub.s32 512, 512
      %24 = vsyncadd [#allocation6], %s23
      %s25 = sshll.u32 [#allocation5], 4
      %s26 = int_to_ptr.vmem [resolvable:$true] %s25
      %31 = dma.hbm_to_vmem [thread:$0]  %s1, 512, %s26, [#allocation6], 128, 128, 8
    $region9: #{tpu_custom_call.1} parent=1 // pred_fallthru
      _
    // Predicated region
    $region10: #{tpu_custom_call.1} parent=1 // pred_check
      _
    $region11: #{tpu_custom_call.1} parent=1 // pred_check_branch
      %33 = sbr.rel (0) target = $region13
    $region12: #{tpu_custom_call.1} parent=1 // pred_region
      %34 = dma.done [#allocation3], 128
    $region13: #{tpu_custom_call.1} parent=1 // pred_fallthru
      _
    // Predicated region
    $region14: #{tpu_custom_call.1} parent=1 // pred_check
      _
    $region15: #{tpu_custom_call.1} parent=1 // pred_check_branch
      %36 = sbr.rel (0) target = $region17
    $region16: #{tpu_custom_call.1} parent=1 // pred_region
      %37 = dma.done [#allocation6], 512
    $region17: #{tpu_custom_call.1} parent=1 // pred_fallthru
      _
    %v38 = vld [vmem:[#allocation2] sm:$0xff]
    %v39 = vld [vmem:[#allocation5] sm:$0xff]
    %v40 = vld [vmem:[#allocation5 + $0x8] sm:$0xff]
    %v41 = vld [vmem:[#allocation5 + $0x10] sm:$0xff]
    %v42 = vld [vmem:[#allocation5 + $0x18] sm:$0xff]
    %vm43 = vcmask 261120
    %v45 = vsel %vm43, %v38, 0
    %v48 = vsel %vm43, %v39, 0
    %v51 = vsel %vm43, %v40, 0
    %v54 = vsel %vm43, %v41, 0
    %v57 = vsel %vm43, %v42, 0
    %59 = vmatprep.subr.mxu0 0.0
    %60 = vmatpush1.xpose.msra.mxu0 %v48
    %61 = vmatprep.subr.mxu0 0.0
    %62 = vmatpush1.xpose.msra.mxu0 %v51
    %63 = vmatprep.subr.mxu0 0.0
    %64 = vmatpush1.xpose.msra.mxu0 %v54
    %65 = vmatprep.subr.mxu0 0.0
    %66 = vmatpush1.xpose.msra.mxu0 %v57
    %67 = vmatprep.subr.mxu0 0.0
    %68 = vmatpush1.xpose.msra.mxu0 0.0
    %69 = vmatprep.subr.mxu0 0.0
    %70 = vmatpush1.xpose.msra.mxu0 0.0
    %71 = vmatprep.subr.mxu0 0.0
    %72 = vmatpush1.xpose.msra.mxu0 0.0
    %73 = vmatprep.subr.mxu0 0.0
    %74 = vmatpush1.xpose.msra.mxu0 0.0
    %75 = vmatprep.subr.mxu0 0.0
    %76 = vmatpush1.xpose.msra.mxu0 0.0
    %77 = vmatprep.subr.mxu0 0.0
    %78 = vmatpush1.xpose.msra.mxu0 0.0
    %79 = vmatprep.subr.mxu0 0.0
    %80 = vmatpush1.xpose.msra.mxu0 0.0
    %81 = vmatprep.subr.mxu0 0.0
    %82 = vmatpush1.xpose.msra.mxu0 0.0
    %83 = vmatprep.subr.mxu0 0.0
    %84 = vmatpush1.xpose.msra.mxu0 0.0
    %85 = vmatprep.subr.mxu0 0.0
    %86 = vmatpush1.xpose.msra.mxu0 0.0
    %87 = vmatprep.subr.mxu0 0.0
    %88 = vmatpush1.xpose.msra.mxu0 0.0
    %89 = vmatprep.subr.mxu0 0.0
    %90 = vmatpush1.xpose.msra.mxu0 0.0
    %91 = vmatprep.subr.mxu0 0.0
    %92 = vmatpush1.xpose.msra.mxu0 0.0
    %93 = vmatprep.subr.mxu0 0.0
    %94 = vmatpush1.xpose.msra.mxu0 0.0
    %95 = vmatprep.subr.mxu0 0.0
    %96 = vmatpush1.xpose.msra.mxu0 0.0
    %97 = vmatprep.subr.mxu0 0.0
    %98 = vmatpush1.xpose.msra.mxu0 0.0
    %99 = vmatprep.subr.mxu0 0.0
    %100 = vmatpush1.xpose.msra.mxu0 0.0
    %101 = vmatprep.subr.mxu0 0.0
    %102 = vmatpush1.xpose.msra.mxu0 0.0
    %103 = vmatprep.subr.mxu0 0.0
    %104 = vmatpush1.xpose.msra.mxu0 0.0
    %105 = vmatprep.subr.mxu0 0.0
    %106 = vmatpush1.xpose.msra.mxu0 0.0
    %107 = vmatprep.subr.mxu0 0.0
    %108 = vmatpush1.xpose.msra.mxu0 0.0
    %109 = vmatprep.subr.mxu0 0.0
    %110 = vmatpush1.xpose.msra.mxu0 0.0
    %111 = vmatprep.subr.mxu0 0.0
    %112 = vmatpush1.xpose.msra.mxu0 0.0
    %113 = vmatprep.subr.mxu0 0.0
    %114 = vmatpush1.xpose.msra.mxu0 0.0
    %115 = vmatprep.subr.mxu0 0.0
    %116 = vmatpush1.xpose.msra.mxu0 0.0
    %117 = vmatprep.subr.mxu0 0.0
    %118 = vmatpush1.xpose.msra.mxu0 0.0
    %119 = vmatprep.subr.mxu0 0.0
    %120 = vmatpush1.xpose.msra.mxu0 0.0
    %121 = vmatprep.subr.mxu0 0.0
    %122 = vmatpush1.xpose.msra.mxu0 0.0
    %123 = vmatprep.mubr.f32.mxu0 0.0
    %124 = vmatmul.mubr.f32.gmra.mrb[0].mxu0 %v45
    %v125 = vpop.f32.mrb[0].mxu0
    %v126 = vadd.f32 0.0, %v125
    %v127 = vpop.f32.mrb[0].mxu0
    %128 = vdwg.mxu0
    %129 = vst.msk [vmem:[#allocation7] sm:$0xff] %vm43, %v126
    // Predicated region
    $region18: #{tpu_custom_call.1} parent=1 // pred_check
      _
    $region19: #{tpu_custom_call.1} parent=1 // pred_check_branch
      %131 = sbr.rel (0) target = $region21
    $region20: #{tpu_custom_call.1} parent=1 // pred_region
      %s133 = ssub.s32 128, 128
      %134 = vsyncadd [#allocation4], %s133
      %s136 = sshll.u32 [#allocation7], 4
      %s137 = int_to_ptr.vmem [resolvable:$true] %s136
      %139 = dma.vmem_to_hbm [thread:$0]  %s137, 128, %s2, [#allocation4]
    $region21: #{tpu_custom_call.1} parent=1 // pred_fallthru
      _
    // Predicated region
    $region22: #{tpu_custom_call.1} parent=1 // pred_check
      _
    $region23: #{tpu_custom_call.1} parent=1 // pred_check_branch
      %141 = sbr.rel (0) target = $region25
    $region24: #{tpu_custom_call.1} parent=1 // pred_region
      %142 = dma.done [#allocation4], 128
    $region25: #{tpu_custom_call.1} parent=1 // pred_fallthru
      _
    %143 = vsyncpa [#allocation3], 1
    %144 = vsyncpa [#allocation6], 1
    %145 = vsyncpa [#allocation4], 1

</llo_original>
